<compile_context>
chip_gen: v5e
topology: v5e:2x2
jax: 0.10.0
libtpu: 0.0.40
codegen_flags: <defaults>
</compile_context>

<pallas_src>
import functools

import jax
import jax.numpy as jnp
from jax.experimental import pallas as pl
from jax.experimental.pallas import tpu as pltpu

_LANE = 128
_SUBLANE = 8


def _round_up(n, m):
    return ((n + m - 1) // m) * m


def _fused_mlp_kernel(x_ref, *refs, n_layers):
    """o = sigmoid(relu(...relu(x@W1+b1)...)@Wn+bn) on one batch tile.

    refs = (w1, b1, w2, b2, ..., wn, bn, o_ref).  Weights are bf16
    (MXU-native operands), biases are f32; bias-add / ReLU / sigmoid run in
    f32 on the VPU/EUP with f32 matmul accumulation.  Intermediate
    activations never leave vregs/VMEM.
    """
    o_ref = refs[-1]
    h = x_ref[...]                                        # f32 [tm, K or 128]
    for li in range(n_layers):
        w = refs[2 * li][...]                             # bf16 [in_p, out_p]
        b = refs[2 * li + 1][...]                         # f32  [1, out_p]
        acc = jnp.dot(h.astype(jnp.bfloat16), w,
                      preferred_element_type=jnp.float32) + b
        if li == n_layers - 1:
            h = jax.nn.sigmoid(acc)                       # final layer
        else:
            h = jnp.maximum(acc, 0.0)                     # hidden layers: ReLU
    o_ref[...] = h.astype(o_ref.dtype)


def prepare_mlp_params(params):
    """One-time parameter preparation (hoisted out of the forward):

      * every layer's OUTPUT width (including the final N=1 layer) is
        zero-padded to a multiple of 128 lanes so all intermediate compute and
        the final store are lane-dense (zero padding is exact through ReLU;
        the final padded columns hold sigmoid(0)=0.5 and are sliced off in
        the wrapper),
      * each layer's IN-dim is padded to the previous layer's padded width
        (zero rows contribute nothing); the FIRST layer keeps the true K so x
        never has to be padded,
      * weights are cast to bf16 once; biases stay f32.

    Returns a flat list [w1, b1, w2, b2, ..., wn, bn].
    """
    prepared = []
    prev_out_p = None
    for li, (w, b) in enumerate(params):
        k, n = w.shape
        in_p = k if li == 0 else prev_out_p
        out_p = _round_up(n, _LANE)
        w_p = jnp.pad(w.astype(jnp.float32),
                      ((0, in_p - k), (0, out_p - n))).astype(jnp.bfloat16)
        b_p = jnp.pad(b.astype(jnp.float32).reshape(1, n),
                      ((0, 0), (0, out_p - n)))
        prepared += [w_p, b_p]
        prev_out_p = out_p
    return prepared


def torch_nn_core_forward(x, prepared_params, *, tm=1024):
    """Fused forward pass of TorchNNCore: one pallas_call for the whole MLP.

    x: [M, K] float32 (unpadded).  prepared_params: output of
    prepare_mlp_params.  Batch is tiled with a 1-D "parallel" grid; for
    M >= 16 the tile is chosen so the grid has >= 2 steps (keeps both v7x
    TensorCores busy).  Ragged last tiles are handled by Pallas' masked
    output store (rows are independent, so garbage pad rows never escape).
    """
    M, K = x.shape
    n_layers = len(prepared_params) // 2
    assert prepared_params[0].shape[0] == K, "params were not prepared for this K"
    n_out_p = prepared_params[-1].shape[-1]               # padded final width (128)

    # --- batch tiling over M.
    if M < 16:
        tm_eff, gm = M, 1
    else:
        half = _round_up(pl.cdiv(M, 2), _SUBLANE)         # guarantee >= 2 grid steps
        tm_eff = min(max(_SUBLANE, (tm // _SUBLANE) * _SUBLANE), half)
        gm = pl.cdiv(M, tm_eff)

    in_specs = [pl.BlockSpec((tm_eff, K), lambda i: (i, 0))]   # x: last dim = full K
    for li in range(n_layers):
        w = prepared_params[2 * li]
        b = prepared_params[2 * li + 1]
        in_specs += [
            pl.BlockSpec(w.shape, lambda i: (0, 0)),      # weight: VMEM-resident
            pl.BlockSpec(b.shape, lambda i: (0, 0)),      # bias:   VMEM-resident
        ]

    kernel = functools.partial(_fused_mlp_kernel, n_layers=n_layers)
    out_padded = pl.pallas_call(
        kernel,
        out_shape=jax.ShapeDtypeStruct((M, n_out_p), jnp.float32),
        grid=(gm,),
        in_specs=in_specs,
        out_specs=pl.BlockSpec((tm_eff, n_out_p), lambda i: (i, 0)),
        compiler_params=pltpu.CompilerParams(
            dimension_semantics=("parallel",)),
    )(x, *prepared_params)

    # Final Linear has out_features == 1; padded output columns hold
    # sigmoid(0) = 0.5 and must be dropped.
    return out_padded[:, :1]


def init_mlp_params(key, inps, hiddens, bias=True):
    """Deterministic init mimicking torch.nn.Linear default:
    W, b ~ U(-1/sqrt(in_features), 1/sqrt(in_features))."""
    struct = [inps] + list(hiddens) + [1]
    params = []
    for i in range(1, len(struct)):
        fan_in, fan_out = struct[i - 1], struct[i]
        key, kw, kb = jax.random.split(key, 3)
        bound = 1.0 / jnp.sqrt(jnp.float32(fan_in))
        w = jax.random.uniform(kw, (fan_in, fan_out), jnp.float32,
                               minval=-bound, maxval=bound)
        if bias:
            b = jax.random.uniform(kb, (fan_out,), jnp.float32,
                                   minval=-bound, maxval=bound)
        else:
            b = jnp.zeros((fan_out,), jnp.float32)
        params.append((w, b))
    return params


def mlp_reference(x, params):
    """Pure-JAX (f32) reference of the PyTorch module's forward."""
    h = x
    n = len(params)
    for li, (w, b) in enumerate(params):
        z = h @ w + b
        h = jax.nn.sigmoid(z) if li == n - 1 else jnp.maximum(z, 0.0)
    return h


if __name__ == "__main__":
    key = jax.random.PRNGKey(0)

    # Small shapes consistent with the module: inps=32, hiddens=[32, 16], batch=8.
    batch, inps = 8, 32
    hiddens = [32, 16]

    key, kx, kp = jax.random.split(key, 3)
    x = jax.random.normal(kx, (batch, inps), jnp.float32)
    params = init_mlp_params(kp, inps, hiddens, bias=True)
    prepared = prepare_mlp_params(params)            # one-time prep (pad + bf16)

    out = jax.block_until_ready(torch_nn_core_forward(x, prepared))
    ref = mlp_reference(x, params)
    assert out.shape == (batch, 1), out.shape
    assert bool(jnp.allclose(out, ref, atol=2e-2, rtol=2e-2))
    assert bool(jnp.all((out > 0.0) & (out < 1.0)))

    # Exercise the gridded path (M=512 -> tm_eff=256, grid=(2,), "parallel").
    xb = jax.random.normal(jax.random.PRNGKey(1), (512, inps), jnp.float32)
    outb = jax.block_until_ready(torch_nn_core_forward(xb, prepared))
    refb = mlp_reference(xb, params)
    assert outb.shape == (512, 1), outb.shape
    assert bool(jnp.allclose(outb, refb, atol=2e-2, rtol=2e-2))

    print("KERNEL_OK")
</pallas_src>

<mosaic_0001>
module attributes {stable_mosaic.version = 11 : i64} {
  func.func @_fused_mlp_kernel(%arg0: i32, %arg1: memref<8x32xf32, #tpu.memory_space<vmem>>, %arg2: memref<32x128xbf16, #tpu.memory_space<vmem>>, %arg3: memref<1x128xf32, #tpu.memory_space<vmem>>, %arg4: memref<128x128xbf16, #tpu.memory_space<vmem>>, %arg5: memref<1x128xf32, #tpu.memory_space<vmem>>, %arg6: memref<128x128xbf16, #tpu.memory_space<vmem>>, %arg7: memref<1x128xf32, #tpu.memory_space<vmem>>, %arg8: memref<8x128xf32, #tpu.memory_space<vmem>>) attributes {dimension_semantics = [#tpu.dimension_semantics<parallel>], iteration_bounds = array<i64: 1>, scalar_prefetch = 0 : i64, scratch_operands = 0 : i64, tpu.core_type = #tpu.core_type<tc>, window_params = [{transform_indices = @transform_0, window_bounds = array<i64: 8, 32>}, {pipeline_mode = #tpu.pipeline_mode<synchronous>, transform_indices = @transform_1, window_bounds = array<i64: 32, 128>}, {pipeline_mode = #tpu.pipeline_mode<synchronous>, transform_indices = @transform_2, window_bounds = array<i64: 1, 128>}, {pipeline_mode = #tpu.pipeline_mode<synchronous>, transform_indices = @transform_3, window_bounds = array<i64: 128, 128>}, {pipeline_mode = #tpu.pipeline_mode<synchronous>, transform_indices = @transform_4, window_bounds = array<i64: 1, 128>}, {pipeline_mode = #tpu.pipeline_mode<synchronous>, transform_indices = @transform_5, window_bounds = array<i64: 128, 128>}, {pipeline_mode = #tpu.pipeline_mode<synchronous>, transform_indices = @transform_6, window_bounds = array<i64: 1, 128>}, {transform_indices = @transform_7, window_bounds = array<i64: 8, 128>}]} {
    %c0 = arith.constant 0 : index
    %c0_0 = arith.constant 0 : index
    %0 = vector.load %arg1[%c0, %c0_0] : memref<8x32xf32, #tpu.memory_space<vmem>>, vector<8x32xf32>
    %c0_1 = arith.constant 0 : index
    %c0_2 = arith.constant 0 : index
    %1 = vector.load %arg2[%c0_1, %c0_2] : memref<32x128xbf16, #tpu.memory_space<vmem>>, vector<32x128xbf16>
    %c0_3 = arith.constant 0 : index
    %c0_4 = arith.constant 0 : index
    %2 = vector.load %arg3[%c0_3, %c0_4] : memref<1x128xf32, #tpu.memory_space<vmem>>, vector<1x128xf32>
    %3 = arith.truncf %0 : vector<8x32xf32> to vector<8x32xbf16>
    %cst = arith.constant dense<0.000000e+00> : vector<8x128xf32>
    %4 = tpu.matmul %3, %1, %cst {dimension_numbers = #tpu.dot_dimension_numbers<[1], [0], [0], [1], [0, 0, 1, 1], [], []>} : vector<8x32xbf16>, vector<32x128xbf16>, vector<8x128xf32> -> vector<8x128xf32>
    %5 = vector.broadcast %2 : vector<1x128xf32> to vector<8x128xf32>
    %6 = arith.addf %4, %5 : vector<8x128xf32>
    %cst_5 = arith.constant 0.000000e+00 : f32
    %7 = vector.broadcast %cst_5 : f32 to vector<8x128xf32>
    %8 = arith.maximumf %6, %7 : vector<8x128xf32>
    %c0_6 = arith.constant 0 : index
    %c0_7 = arith.constant 0 : index
    %9 = vector.load %arg4[%c0_6, %c0_7] : memref<128x128xbf16, #tpu.memory_space<vmem>>, vector<128x128xbf16>
    %c0_8 = arith.constant 0 : index
    %c0_9 = arith.constant 0 : index
    %10 = vector.load %arg5[%c0_8, %c0_9] : memref<1x128xf32, #tpu.memory_space<vmem>>, vector<1x128xf32>
    %11 = arith.truncf %8 : vector<8x128xf32> to vector<8x128xbf16>
    %cst_10 = arith.constant dense<0.000000e+00> : vector<8x128xf32>
    %12 = tpu.matmul %11, %9, %cst_10 {dimension_numbers = #tpu.dot_dimension_numbers<[1], [0], [0], [1], [0, 0, 1, 1], [], []>} : vector<8x128xbf16>, vector<128x128xbf16>, vector<8x128xf32> -> vector<8x128xf32>
    %13 = vector.broadcast %10 : vector<1x128xf32> to vector<8x128xf32>
    %14 = arith.addf %12, %13 : vector<8x128xf32>
    %cst_11 = arith.constant 0.000000e+00 : f32
    %15 = vector.broadcast %cst_11 : f32 to vector<8x128xf32>
    %16 = arith.maximumf %14, %15 : vector<8x128xf32>
    %c0_12 = arith.constant 0 : index
    %c0_13 = arith.constant 0 : index
    %17 = vector.load %arg6[%c0_12, %c0_13] : memref<128x128xbf16, #tpu.memory_space<vmem>>, vector<128x128xbf16>
    %c0_14 = arith.constant 0 : index
    %c0_15 = arith.constant 0 : index
    %18 = vector.load %arg7[%c0_14, %c0_15] : memref<1x128xf32, #tpu.memory_space<vmem>>, vector<1x128xf32>
    %19 = arith.truncf %16 : vector<8x128xf32> to vector<8x128xbf16>
    %cst_16 = arith.constant dense<0.000000e+00> : vector<8x128xf32>
    %20 = tpu.matmul %19, %17, %cst_16 {dimension_numbers = #tpu.dot_dimension_numbers<[1], [0], [0], [1], [0, 0, 1, 1], [], []>} : vector<8x128xbf16>, vector<128x128xbf16>, vector<8x128xf32> -> vector<8x128xf32>
    %21 = vector.broadcast %18 : vector<1x128xf32> to vector<8x128xf32>
    %22 = arith.addf %20, %21 : vector<8x128xf32>
    %23 = arith.negf %22 : vector<8x128xf32>
    %24 = math.exp %23 : vector<8x128xf32>
    %cst_17 = arith.constant 1.000000e+00 : f32
    %25 = vector.broadcast %cst_17 : f32 to vector<8x128xf32>
    %26 = arith.addf %25, %24 : vector<8x128xf32>
    %27 = arith.divf %25, %26 : vector<8x128xf32>
    %c0_18 = arith.constant 0 : index
    %c0_19 = arith.constant 0 : index
    %28 = vector.load %arg8[%c0_18, %c0_19] : memref<8x128xf32, #tpu.memory_space<vmem>>, vector<8x128xf32>
    tpu.vector_store %arg8[%c0_18, %c0_19], %27 {strides = array<i32>} : memref<8x128xf32, #tpu.memory_space<vmem>>, vector<8x128xf32>,
    return
  }
  func.func @transform_0(%arg0: i32) -> (i32, i32) {
    %c0_i32 = arith.constant 0 : i32
    %c0_i32_0 = arith.constant 0 : i32
    return %arg0, %c0_i32 : i32, i32
  }
  func.func @transform_1(%arg0: i32) -> (i32, i32) {
    %c0_i32 = arith.constant 0 : i32
    %c0_i32_0 = arith.constant 0 : i32
    %c0_i32_1 = arith.constant 0 : i32
    return %c0_i32, %c0_i32_0 : i32, i32
  }
  func.func @transform_2(%arg0: i32) -> (i32, i32) {
    %c0_i32 = arith.constant 0 : i32
    %c0_i32_0 = arith.constant 0 : i32
    %c0_i32_1 = arith.constant 0 : i32
    return %c0_i32, %c0_i32_0 : i32, i32
  }
  func.func @transform_3(%arg0: i32) -> (i32, i32) {
    %c0_i32 = arith.constant 0 : i32
    %c0_i32_0 = arith.constant 0 : i32
    %c0_i32_1 = arith.constant 0 : i32
    return %c0_i32, %c0_i32_0 : i32, i32
  }
  func.func @transform_4(%arg0: i32) -> (i32, i32) {
    %c0_i32 = arith.constant 0 : i32
    %c0_i32_0 = arith.constant 0 : i32
    %c0_i32_1 = arith.constant 0 : i32
    return %c0_i32, %c0_i32_0 : i32, i32
  }
  func.func @transform_5(%arg0: i32) -> (i32, i32) {
    %c0_i32 = arith.constant 0 : i32
    %c0_i32_0 = arith.constant 0 : i32
    %c0_i32_1 = arith.constant 0 : i32
    return %c0_i32, %c0_i32_0 : i32, i32
  }
  func.func @transform_6(%arg0: i32) -> (i32, i32) {
    %c0_i32 = arith.constant 0 : i32
    %c0_i32_0 = arith.constant 0 : i32
    %c0_i32_1 = arith.constant 0 : i32
    return %c0_i32, %c0_i32_0 : i32, i32
  }
  func.func @transform_7(%arg0: i32) -> (i32, i32) {
    %c0_i32 = arith.constant 0 : i32
    %c0_i32_0 = arith.constant 0 : i32
    return %arg0, %c0_i32 : i32, i32
  }
}

</mosaic_0001>

<llo_original>
// kernel: tpu_custom_call.1
$region0: #{tpu_custom_call.1}
  #allocation0 [shape = 'u32[]', space=smem, size = 0x4, offset = 0x4, fixed_abs, tag = 'smem constant byte address 0x4 - core index']
  #allocation1 [shape = 'u32[72,128]{1,0:T(1,128)}', space=vmem, size = 0x9000, scoped, tag = 'internal scratch']
  %s0 = inlined_call_operand.hbm [shape: f32[8,32], index: 0, kind: input, shape index: {}]
  %s1 = inlined_call_operand.hbm [shape: bf16[32,128], index: 1, kind: input, shape index: {}]
  %s2 = inlined_call_operand.vmem [shape: f32[1,128], index: 2, kind: input, shape index: {}]
  %s3 = inlined_call_operand.hbm [shape: bf16[128,128], index: 3, kind: input, shape index: {}]
  %s4 = inlined_call_operand.vmem [shape: f32[1,128], index: 4, kind: input, shape index: {}]
  %s5 = inlined_call_operand.hbm [shape: bf16[128,128], index: 5, kind: input, shape index: {}]
  %s6 = inlined_call_operand.vmem [shape: f32[1,128], index: 6, kind: input, shape index: {}]
  %s7 = inlined_call_operand.hbm [shape: f32[8,128], index: 7, kind: output, shape index: {}]
  %s8 = sld [smem:[#allocation0]]
  $region54: #{tpu_custom_call.1} parent=0
    _
  %s10 = ssub.s32 1, %s8
  %s11 = scalar_select 0, %s10, %s8
  $region1: #{tpu_custom_call.1} parent=0
    #allocation2 [shape = 'u8[4096]{0}', space=vmem, size = 0x1000, scoped, tag = 'input window, operand 0, single buffered']
    #allocation3 [shape = 's32[1]{0}', space=sflag, size = 0x4, scoped, tag = 'scoped memory for tpu_custom_call.1']
    #allocation4 [shape = 's32[1]{0}', space=sflag, size = 0x4, scoped, tag = 'scoped memory for tpu_custom_call.1']
    #allocation5 [shape = 'u8[8192]{0}', space=vmem, size = 0x2000, scoped, tag = 'input window, operand 1, single buffered']
    #allocation6 [shape = 's32[1]{0}', space=sflag, size = 0x4, scoped, tag = 'scoped memory for tpu_custom_call.1']
    #allocation7 [shape = 'u8[32768]{0}', space=vmem, size = 0x8000, scoped, tag = 'input window, operand 3, single buffered']
    #allocation8 [shape = 'u8[32768]{0}', space=vmem, size = 0x8000, scoped, tag = 'input window, operand 5, single buffered']
    #allocation9 [shape = 's32[1]{0}', space=sflag, size = 0x4, scoped, tag = 'scoped memory for tpu_custom_call.1']
    #allocation10 [shape = 'u8[4096]{0}', space=vmem, size = 0x1000, scoped, tag = 'output window, operand 0, single buffered']
    %12 = vsyncpa [#allocation3], 0
    %13 = vsyncpa [#allocation6], 0
    %14 = vsyncpa [#allocation9], 0
    %15 = vsyncpa [#allocation4], 0
    // Predicated region
    $region2: #{tpu_custom_call.1} parent=1 // pred_check
      _
    $region3: #{tpu_custom_call.1} parent=1 // pred_check_branch
      %17 = sbr.rel (0) target = $region5
    $region4: #{tpu_custom_call.1} parent=1 // pred_region
      %19 = vsyncadd [#allocation3], 0
      %s21 = sshll.u32 %s0, 4
      %s22 = int_to_ptr.hbm [resolvable:$true] %s21
      %s23 = sshll.u32 [#allocation2], 4
      %s24 = int_to_ptr.vmem [resolvable:$true] %s23
      %26 = dma.hbm_to_vmem [thread:$0]  %s22, 128, %s24, [#allocation3]
    $region5: #{tpu_custom_call.1} parent=1 // pred_fallthru
      _
    // Predicated region
    $region6: #{tpu_custom_call.1} parent=1 // pred_check
      _
    $region7: #{tpu_custom_call.1} parent=1 // pred_check_branch
      %28 = sbr.rel (0) target = $region9
    $region8: #{tpu_custom_call.1} parent=1 // pred_region
      %30 = vsyncadd [#allocation6], 0
      %s31 = sshll.u32 %s1, 4
      %s32 = int_to_ptr.hbm [resolvable:$true] %s31
      %s33 = sshll.u32 [#allocation5], 4
      %s34 = int_to_ptr.vmem [resolvable:$true] %s33
      %39 = dma.hbm_to_vmem [thread:$0]  %s32, 256, %s34, [#allocation6], 64, 64, 4
    $region9: #{tpu_custom_call.1} parent=1 // pred_fallthru
      _
    // Predicated region
    $region10: #{tpu_custom_call.1} parent=1 // pred_check
      _
    $region11: #{tpu_custom_call.1} parent=1 // pred_check_branch
      %41 = sbr.rel (0) target = $region13
    $region12: #{tpu_custom_call.1} parent=1 // pred_region
      _
    $region13: #{tpu_custom_call.1} parent=1 // pred_fallthru
      _
    // Predicated region
    $region14: #{tpu_custom_call.1} parent=1 // pred_check
      _
    $region15: #{tpu_custom_call.1} parent=1 // pred_check_branch
      %43 = sbr.rel (0) target = $region17
    $region16: #{tpu_custom_call.1} parent=1 // pred_region
      %45 = vsyncadd [#allocation6], 0
      %s46 = sshll.u32 %s3, 4
      %s47 = int_to_ptr.hbm [resolvable:$true] %s46
      %s48 = sshll.u32 [#allocation7], 4
      %s49 = int_to_ptr.vmem [resolvable:$true] %s48
      %54 = dma.hbm_to_vmem [thread:$0]  %s47, 1024, %s49, [#allocation6], 64, 64, 4
    $region17: #{tpu_custom_call.1} parent=1 // pred_fallthru
      _
    // Predicated region
    $region18: #{tpu_custom_call.1} parent=1 // pred_check
      _
    $region19: #{tpu_custom_call.1} parent=1 // pred_check_branch
      %56 = sbr.rel (0) target = $region21
    $region20: #{tpu_custom_call.1} parent=1 // pred_region
      _
    $region21: #{tpu_custom_call.1} parent=1 // pred_fallthru
      _
    // Predicated region
    $region22: #{tpu_custom_call.1} parent=1 // pred_check
      _
    $region23: #{tpu_custom_call.1} parent=1 // pred_check_branch
      %58 = sbr.rel (0) target = $region25
    $region24: #{tpu_custom_call.1} parent=1 // pred_region
      %60 = vsyncadd [#allocation9], 0
      %s61 = sshll.u32 %s5, 4
      %s62 = int_to_ptr.hbm [resolvable:$true] %s61
      %s63 = sshll.u32 [#allocation8], 4
      %s64 = int_to_ptr.vmem [resolvable:$true] %s63
      %69 = dma.hbm_to_vmem [thread:$0]  %s62, 1024, %s64, [#allocation9], 64, 64, 4
    $region25: #{tpu_custom_call.1} parent=1 // pred_fallthru
      _
    // Predicated region
    $region26: #{tpu_custom_call.1} parent=1 // pred_check
      _
    $region27: #{tpu_custom_call.1} parent=1 // pred_check_branch
      %71 = sbr.rel (0) target = $region29
    $region28: #{tpu_custom_call.1} parent=1 // pred_region
      _
    $region29: #{tpu_custom_call.1} parent=1 // pred_fallthru
      _
    // Predicated region
    $region30: #{tpu_custom_call.1} parent=1 // pred_check
      _
    $region31: #{tpu_custom_call.1} parent=1 // pred_check_branch
      %73 = sbr.rel (0) target = $region33
    $region32: #{tpu_custom_call.1} parent=1 // pred_region
      %75 = dma.done [#allocation3], 128
    $region33: #{tpu_custom_call.1} parent=1 // pred_fallthru
      _
    // Predicated region
    $region34: #{tpu_custom_call.1} parent=1 // pred_check
      _
    $region35: #{tpu_custom_call.1} parent=1 // pred_check_branch
      %77 = sbr.rel (0) target = $region37
    $region36: #{tpu_custom_call.1} parent=1 // pred_region
      %79 = dma.done [#allocation6], 256
    $region37: #{tpu_custom_call.1} parent=1 // pred_fallthru
      _
    // Predicated region
    $region38: #{tpu_custom_call.1} parent=1 // pred_check
      _
    $region39: #{tpu_custom_call.1} parent=1 // pred_check_branch
      %81 = sbr.rel (0) target = $region41
    $region40: #{tpu_custom_call.1} parent=1 // pred_region
      %83 = dma.done [#allocation6], 1024
    $region41: #{tpu_custom_call.1} parent=1 // pred_fallthru
      _
    // Predicated region
    $region42: #{tpu_custom_call.1} parent=1 // pred_check
      _
    $region43: #{tpu_custom_call.1} parent=1 // pred_check_branch
      %85 = sbr.rel (0) target = $region45
    $region44: #{tpu_custom_call.1} parent=1 // pred_region
      %87 = dma.done [#allocation9], 1024
    $region45: #{tpu_custom_call.1} parent=1 // pred_fallthru
      _
    %v89 = vld [vmem:[#allocation2] sm:$0xff]
    %v90 = vld [vmem:[#allocation5] sm:$0xf]
    %v91 = vld [vmem:[#allocation5 + $0x4] sm:$0xf]
    %v92 = vld [vmem:[#allocation5 + $0x8] sm:$0xf]
    %v93 = vld [vmem:[#allocation5 + $0xc] sm:$0xf]
    %v94 = vld [vmem:[%s2] sm:$0x1]
    %v95 = vpack.c.bf16 %v89, %v89
    %v97 = vperm.slane %v94, 0
    %v103 = vunpack.c.l.b16 %v90
    %v104 = vunpack.c.l.b16 %v91
    %v105 = vunpack.c.l.b16 %v92
    %v106 = vunpack.c.l.b16 %v93
    %v107 = vpack.c.b16 %v104, %v103
    %v108 = vpack.c.b16 %v106, %v105
    %vm111 = vcmask 261120
    %v113 = vsel %vm111, %v95, 0
    %115 = vmatpush.bf16.msra.mxu0 0
    %116 = vmatpush.bf16.msra.mxu0 0
    %117 = vmatpush.bf16.msra.mxu0 0
    %118 = vmatpush.bf16.msra.mxu0 0
    %119 = vmatpush.bf16.msra.mxu0 0
    %120 = vmatpush.bf16.msra.mxu0 0
    %121 = vmatpush.bf16.msra.mxu0 %v108
    %122 = vmatpush.bf16.msra.mxu0 %v107
    %123 = vmatmul.bf16.gmra.mxu0 %v113
    %v124 = vpop.f32.mrf.mxu0
    %v125 = vadd.f32 %v97, %v124
    %v126 = vpop.f32.mrf.mxu0
    %127 = vdwg.mxu0
    %v128 = vmax.f32 %v125, 0.0
    %v129 = vld [vmem:[#allocation7] sm:$0xf]
    %v130 = vld [vmem:[#allocation7 + $0x4] sm:$0xf]
    %v131 = vld [vmem:[#allocation7 + $0x8] sm:$0xf]
    %v132 = vld [vmem:[#allocation7 + $0xc] sm:$0xf]
    %v133 = vld [vmem:[#allocation7 + $0x10] sm:$0xf]
    %v134 = vld [vmem:[#allocation7 + $0x14] sm:$0xf]
    %v135 = vld [vmem:[#allocation7 + $0x18] sm:$0xf]
    %v136 = vld [vmem:[#allocation7 + $0x1c] sm:$0xf]
    %v137 = vld [vmem:[#allocation7 + $0x20] sm:$0xf]
    %v138 = vld [vmem:[#allocation7 + $0x24] sm:$0xf]
    %v139 = vld [vmem:[#allocation7 + $0x28] sm:$0xf]
    %v140 = vld [vmem:[#allocation7 + $0x2c] sm:$0xf]
    %v141 = vld [vmem:[#allocation7 + $0x30] sm:$0xf]
    %v142 = vld [vmem:[#allocation7 + $0x34] sm:$0xf]
    %v143 = vld [vmem:[#allocation7 + $0x38] sm:$0xf]
    %v144 = vld [vmem:[#allocation7 + $0x3c] sm:$0xf]
    %v145 = vld [vmem:[%s4] sm:$0x1]
    %v146 = vpack.c.bf16 %v128, %v128
    %v148 = vperm.slane %v145, 0
    %v166 = vunpack.c.l.b16 %v129
    %v167 = vunpack.c.l.b16 %v130
    %v168 = vunpack.c.l.b16 %v131
    %v169 = vunpack.c.l.b16 %v132
    %v170 = vunpack.c.l.b16 %v133
    %v171 = vunpack.c.l.b16 %v134
    %v172 = vunpack.c.l.b16 %v135
    %v173 = vunpack.c.l.b16 %v136
    %v174 = vunpack.c.l.b16 %v137
    %v175 = vunpack.c.l.b16 %v138
    %v176 = vunpack.c.l.b16 %v139
    %v177 = vunpack.c.l.b16 %v140
    %v178 = vunpack.c.l.b16 %v141
    %v179 = vunpack.c.l.b16 %v142
    %v180 = vunpack.c.l.b16 %v143
    %v181 = vunpack.c.l.b16 %v144
    %v182 = vpack.c.b16 %v167, %v166
    %v183 = vpack.c.b16 %v169, %v168
    %v184 = vpack.c.b16 %v171, %v170
    %v185 = vpack.c.b16 %v173, %v172
    %v186 = vpack.c.b16 %v175, %v174
    %v187 = vpack.c.b16 %v177, %v176
    %v188 = vpack.c.b16 %v179, %v178
    %v189 = vpack.c.b16 %v181, %v180
    %198 = vmatpush.bf16.msra.mxu0 %v189
    %199 = vmatpush.bf16.msra.mxu0 %v188
    %200 = vmatpush.bf16.msra.mxu0 %v187
    %201 = vmatpush.bf16.msra.mxu0 %v186
    %202 = vmatpush.bf16.msra.mxu0 %v185
    %203 = vmatpush.bf16.msra.mxu0 %v184
    %204 = vmatpush.bf16.msra.mxu0 %v183
    %205 = vmatpush.bf16.msra.mxu0 %v182
    %206 = vmatmul.bf16.gmra.mxu0 %v146
    %v207 = vpop.f32.mrf.mxu0
    %v208 = vadd.f32 %v148, %v207
    %v209 = vpop.f32.mrf.mxu0
    %210 = vdwg.mxu0
    %v211 = vmax.f32 %v208, 0.0
    %v212 = vld [vmem:[#allocation8] sm:$0xf]
    %v213 = vld [vmem:[#allocation8 + $0x4] sm:$0xf]
    %v214 = vld [vmem:[#allocation8 + $0x8] sm:$0xf]
    %v215 = vld [vmem:[#allocation8 + $0xc] sm:$0xf]
    %v216 = vld [vmem:[#allocation8 + $0x10] sm:$0xf]
    %v217 = vld [vmem:[#allocation8 + $0x14] sm:$0xf]
    %v218 = vld [vmem:[#allocation8 + $0x18] sm:$0xf]
    %v219 = vld [vmem:[#allocation8 + $0x1c] sm:$0xf]
    %v220 = vld [vmem:[#allocation8 + $0x20] sm:$0xf]
    %v221 = vld [vmem:[#allocation8 + $0x24] sm:$0xf]
    %v222 = vld [vmem:[#allocation8 + $0x28] sm:$0xf]
    %v223 = vld [vmem:[#allocation8 + $0x2c] sm:$0xf]
    %v224 = vld [vmem:[#allocation8 + $0x30] sm:$0xf]
    %v225 = vld [vmem:[#allocation8 + $0x34] sm:$0xf]
    %v226 = vld [vmem:[#allocation8 + $0x38] sm:$0xf]
    %v227 = vld [vmem:[#allocation8 + $0x3c] sm:$0xf]
    %v228 = vld [vmem:[%s6] sm:$0x1]
    %v229 = vpack.c.bf16 %v211, %v211
    %v231 = vperm.slane %v228, 0
    %v249 = vunpack.c.l.b16 %v212
    %v250 = vunpack.c.l.b16 %v213
    %v251 = vunpack.c.l.b16 %v214
    %v252 = vunpack.c.l.b16 %v215
    %v253 = vunpack.c.l.b16 %v216
    %v254 = vunpack.c.l.b16 %v217
    %v255 = vunpack.c.l.b16 %v218
    %v256 = vunpack.c.l.b16 %v219
    %v257 = vunpack.c.l.b16 %v220
    %v258 = vunpack.c.l.b16 %v221
    %v259 = vunpack.c.l.b16 %v222
    %v260 = vunpack.c.l.b16 %v223
    %v261 = vunpack.c.l.b16 %v224
    %v262 = vunpack.c.l.b16 %v225
    %v263 = vunpack.c.l.b16 %v226
    %v264 = vunpack.c.l.b16 %v227
    %v265 = vpack.c.b16 %v250, %v249
    %v266 = vpack.c.b16 %v252, %v251
    %v267 = vpack.c.b16 %v254, %v253
    %v268 = vpack.c.b16 %v256, %v255
    %v269 = vpack.c.b16 %v258, %v257
    %v270 = vpack.c.b16 %v260, %v259
    %v271 = vpack.c.b16 %v262, %v261
    %v272 = vpack.c.b16 %v264, %v263
    %281 = vmatpush.bf16.msra.mxu0 %v272
    %282 = vmatpush.bf16.msra.mxu0 %v271
    %283 = vmatpush.bf16.msra.mxu0 %v270
    %284 = vmatpush.bf16.msra.mxu0 %v269
    %285 = vmatpush.bf16.msra.mxu0 %v268
    %286 = vmatpush.bf16.msra.mxu0 %v267
    %287 = vmatpush.bf16.msra.mxu0 %v266
    %288 = vmatpush.bf16.msra.mxu0 %v265
    %289 = vmatmul.bf16.gmra.mxu0 %v229
    %v290 = vpop.f32.mrf.mxu0
    %v291 = vadd.f32 %v231, %v290
    %v292 = vpop.f32.mrf.mxu0
    %293 = vdwg.mxu0
    %v294 = vxor.u32 %v291, 2147483648
    %v295 = vmul.f32 %v294, 1.442695
    %v296 = vpow.pop %v295
    %v297 = vadd.f32 %v296, 1.0
    %v298 = vrcp.pop %v297
    %v299 = vmul.f32 %v297, %v298
    %v300 = vsub.f32 1.0, %v299
    %v301 = vmul.f32 %v298, %v300
    %v302 = vadd.f32 %v298, %v301
    %vm303 = vweird.f32 %v297
    %vm304 = vweird.f32 %v298
    %vm305 = vmor %vm303, %vm304
    %v306 = vsel %vm305, %v298, %v302
    %v307 = vand.u32 2147483647, %v297
    %vm308 = vcmp.eq.f32.partialorder %v307, 8.507059e+37
    %v309 = vand.u32 %v297, 2147483648
    %v310 = vor.u32 1.1754944e-38, %v309
    %v311 = vsel %vm308, %v310, %v306
    %v312 = vmul.f32 1.0, %v311
    %313 = vst [vmem:[#allocation10] sm:$0xff] %v312
    // Predicated region
    $region46: #{tpu_custom_call.1} parent=1 // pred_check
      _
    $region47: #{tpu_custom_call.1} parent=1 // pred_check_branch
      %315 = sbr.rel (0) target = $region49
    $region48: #{tpu_custom_call.1} parent=1 // pred_region
      %317 = vsyncadd [#allocation4], 0
      %s319 = sshll.u32 [#allocation10], 4
      %s320 = int_to_ptr.vmem [resolvable:$true] %s319
      %s321 = sshll.u32 %s7, 4
      %s322 = int_to_ptr.hbm [resolvable:$true] %s321
      %324 = dma.vmem_to_hbm [thread:$0]  %s320, 128, %s322, [#allocation4]
    $region49: #{tpu_custom_call.1} parent=1 // pred_fallthru
      _
    // Predicated region
    $region50: #{tpu_custom_call.1} parent=1 // pred_check
      _
    $region51: #{tpu_custom_call.1} parent=1 // pred_check_branch
      %326 = sbr.rel (0) target = $region53
    $region52: #{tpu_custom_call.1} parent=1 // pred_region
      %328 = dma.done [#allocation4], 128
    $region53: #{tpu_custom_call.1} parent=1 // pred_fallthru
      _
    %329 = vsyncpa [#allocation3], 1
    %330 = vsyncpa [#allocation6], 1
    %331 = vsyncpa [#allocation9], 1
    %332 = vsyncpa [#allocation4], 1

</llo_original>
